<compile_context>
chip_gen: v7x
topology: tpu7x:2x2x1
jax: 0.10.0
libtpu: 0.0.40
codegen_flags: <defaults>
</compile_context>

<pallas_src>
import numpy as np
import jax
import jax.numpy as jnp
from jax.experimental import pallas as pl
from jax.experimental.pallas import tpu as pltpu


# ---------------------------------------------------------------------------
# Fused kernel: whole network for one batch tile
# ---------------------------------------------------------------------------
def _net_kernel(x_ref, w1_ref, b1_ref, w2_ref, b2_ref,
                w3_ref, b3_ref, w4_ref, b4_ref, o_ref):
    """x_ref: (TB, 40) f32 input rows.  o_ref: (TB, 10) f32 log-probabilities.

    w1_ref: (40, 512)  bf16 conv1 Toeplitz, halves at lanes [0,256) / [256,512)
    w2_ref: (256, 512) bf16 conv2 Toeplitz, same half layout
    w3_ref: (256, 50)  bf16 fc1.T (rows 140.. are zero padding)
    w4_ref: (50, 10)   bf16 fc2.T
    b*_ref: (1, cols)  f32 biases (zero on padded columns)
    """
    H1 = w1_ref.shape[1] // 2        # 256 (128-lane aligned half boundary)
    H2 = w2_ref.shape[1] // 2        # 256

    x = x_ref[...].astype(jnp.bfloat16)

    # conv1 -> maxpool(2) -> relu   (one MXU dot covers even+odd conv positions)
    h1 = jnp.dot(x, w1_ref[...], preferred_element_type=jnp.float32) + b1_ref[...]
    r1 = jnp.maximum(jnp.maximum(h1[:, :H1], h1[:, H1:]), 0.0)       # (TB, 256) f32
    r1 = r1.astype(jnp.bfloat16)                                     # halve vst/vld bytes

    # conv2 -> dropout(identity) -> maxpool(2) -> relu
    h2 = jnp.dot(r1, w2_ref[...], preferred_element_type=jnp.float32) + b2_ref[...]
    r2 = jnp.maximum(jnp.maximum(h2[:, :H2], h2[:, H2:]), 0.0)       # (TB, 256) f32
    r2 = r2.astype(jnp.bfloat16)
    # r2 lanes 0..139 hold c_out*7 + pos == PyTorch's view(-1, 20*7) flatten;
    # lanes 140..255 are exactly zero and hit zero rows of w3.

    # fc1 -> relu -> dropout(identity)
    f1 = jnp.maximum(
        jnp.dot(r2, w3_ref[...], preferred_element_type=jnp.float32) + b3_ref[...],
        0.0)                                                         # (TB, 50) f32

    # fc2 -> relu -> log_softmax(dim=1)
    f2 = jnp.maximum(
        jnp.dot(f1.astype(jnp.bfloat16), w4_ref[...],
                preferred_element_type=jnp.float32) + b4_ref[...],
        0.0)                                                         # (TB, 10) f32
    m = jnp.max(f2, axis=1, keepdims=True)
    lse = jnp.log(jnp.sum(jnp.exp(f2 - m), axis=1, keepdims=True)) + m
    o_ref[...] = f2 - lse


# ---------------------------------------------------------------------------
# Host-side (one-time) weight packing: fold conv + maxpool into Toeplitz mats
# ---------------------------------------------------------------------------
def _round_up(a, m):
    return (a + m - 1) // m * m


def _conv_pool_weight(w, b, *, in_len, pool_out_len, in_rows, half_cols):
    """Fused conv+pool weight / bias, with each pool half padded to `half_cols`
    (a multiple of 128) so the kernel's half slices are 128-lane aligned.

    Input  lane layout : c_in * in_len + position            (rows >= real are 0)
    Output lane layout : half*half_cols + c_out*pool_out_len + j
                         half 0 -> conv position 2j, half 1 -> 2j+1; padded
                         columns carry zero weight and zero bias.
    """
    w = np.asarray(w, np.float32)            # (Cout, Cin, K)
    b = np.asarray(b, np.float32)            # (Cout,)
    c_out, c_in, K = w.shape
    W = np.zeros((in_rows, 2 * half_cols), np.float32)
    B = np.zeros((1, 2 * half_cols), np.float32)
    for h in range(2):
        for co in range(c_out):
            for j in range(pool_out_len):
                col = h * half_cols + co * pool_out_len + j
                B[0, col] = b[co]
                for ci in range(c_in):
                    for k in range(K):
                        W[ci * in_len + 2 * j + h + k, col] += w[co, ci, k]
    return W, B


def pack_params(params):
    """Convert PyTorch-layout params into the fused-kernel operand set (once)."""
    w1, b1, w2, b2, fw1, fb1, fw2, fb2 = params

    # conv1: L=40 -> conv 36 -> pool 18 ; half padded 180 -> 256
    w1eo, b1eo = _conv_pool_weight(w1, b1, in_len=40, pool_out_len=18,
                                   in_rows=40, half_cols=256)        # (40, 512)
    # conv2: L=18 -> conv 14 -> pool 7  ; input rows padded 180 -> 256,
    #        half padded 140 -> 256
    w2eo, b2eo = _conv_pool_weight(w2, b2, in_len=18, pool_out_len=7,
                                   in_rows=256, half_cols=256)       # (256, 512)

    # fc1: (50, 140) -> (256, 50) with zero rows for the padded input lanes
    fw1 = np.asarray(fw1, np.float32)
    w3 = np.zeros((256, fw1.shape[0]), np.float32)
    w3[:fw1.shape[1], :] = fw1.T
    b3 = np.asarray(fb1, np.float32)[None, :]                        # (1, 50)

    w4 = np.asarray(fw2, np.float32).T                               # (50, 10)
    b4 = np.asarray(fb2, np.float32)[None, :]                        # (1, 10)

    bf16 = jnp.bfloat16
    return (jnp.asarray(w1eo, bf16), jnp.asarray(b1eo),
            jnp.asarray(w2eo, bf16), jnp.asarray(b2eo),
            jnp.asarray(w3, bf16),   jnp.asarray(b3),
            jnp.asarray(w4, bf16),   jnp.asarray(b4))


# ---------------------------------------------------------------------------
# Forward pass: a single pallas_call with a batch-tiled, parallel grid
# ---------------------------------------------------------------------------
def net_forward(x, packed, *, block_rows=1024):
    """x: (N, 1, 40) float32.  Returns (N, 10) float32 log-probabilities."""
    w1eo, b1eo, w2eo, b2eo, w3, b3, w4, b4 = packed
    N = x.shape[0]
    assert x.shape[1:] == (1, 40), "Net requires input shape (N, 1, 40)"
    x2d = x.reshape(N, 40)

    # Batch tiling:
    #   * multiple of 8 sublanes;
    #   * capped at ceil(N/2) so the parallel axis has >=2 steps (v7x: both TCs);
    #   * prefer a tile that divides the 8-rounded batch, so no whole-array pad.
    N8 = _round_up(N, 8)
    target = max(8, min(block_rows, _round_up(pl.cdiv(N8, 2), 8)))
    TB = target
    for cand in range(target, max(8, target // 2) - 1, -8):
        if N8 % cand == 0:
            TB = cand
            break
    N_pad = _round_up(N8, TB)
    if N_pad != N:
        x2d = jnp.pad(x2d, ((0, N_pad - N), (0, 0)))

    const = lambda i: (0, 0)
    out = pl.pallas_call(
        _net_kernel,
        out_shape=jax.ShapeDtypeStruct((N_pad, w4.shape[1]), jnp.float32),
        grid=(N_pad // TB,),
        in_specs=[
            pl.BlockSpec((TB, 40), lambda i: (i, 0)),                 # x tile
            pl.BlockSpec(w1eo.shape, const),                          # weights stay
            pl.BlockSpec(b1eo.shape, const),                          # resident in
            pl.BlockSpec(w2eo.shape, const),                          # VMEM across
            pl.BlockSpec(b2eo.shape, const),                          # the grid
            pl.BlockSpec(w3.shape, const),
            pl.BlockSpec(b3.shape, const),
            pl.BlockSpec(w4.shape, const),
            pl.BlockSpec(b4.shape, const),
        ],
        out_specs=pl.BlockSpec((TB, w4.shape[1]), lambda i: (i, 0)),
        compiler_params=pltpu.CompilerParams(
            dimension_semantics=("parallel",),
            vmem_limit_bytes=32 * 1024 * 1024),
    )(x2d, w1eo, b1eo, w2eo, b2eo, w3, b3, w4, b4)

    return out[:N] if N_pad != N else out


# ---------------------------------------------------------------------------
# Deterministic parameter init (PyTorch-style uniform bounds)
# ---------------------------------------------------------------------------
def init_params(key):
    ks = jax.random.split(key, 8)

    def u(k, shape, fan_in):
        bound = 1.0 / np.sqrt(fan_in)
        return jax.random.uniform(k, shape, jnp.float32, -bound, bound)

    w1 = u(ks[0], (10, 1, 5), 5)
    b1 = u(ks[1], (10,), 5)
    w2 = u(ks[2], (20, 10, 5), 50)
    b2 = u(ks[3], (20,), 50)
    fw1 = u(ks[4], (50, 140), 140)
    fb1 = u(ks[5], (50,), 140)
    fw2 = u(ks[6], (10, 50), 50)
    fb2 = u(ks[7], (10,), 50)
    return (w1, b1, w2, b2, fw1, fb1, fw2, fb2)


# ---------------------------------------------------------------------------
# Pure-numpy reference (mirrors the PyTorch forward, eval mode)
# ---------------------------------------------------------------------------
def np_reference(x, params):
    w1, b1, w2, b2, fw1, fb1, fw2, fb2 = [np.asarray(p, np.float32) for p in params]
    x = np.asarray(x, np.float32)
    N = x.shape[0]

    h1 = np.zeros((N, 10, 36), np.float32)
    for t in range(36):
        h1[:, :, t] = x[:, 0, t:t + 5] @ w1[:, 0, :].T + b1
    r1 = np.maximum(np.maximum(h1[:, :, 0::2], h1[:, :, 1::2]), 0.0)

    h2 = np.zeros((N, 20, 14), np.float32)
    for t in range(14):
        h2[:, :, t] = np.einsum('nck,dck->nd', r1[:, :, t:t + 5], w2) + b2
    r2 = np.maximum(np.maximum(h2[:, :, 0::2], h2[:, :, 1::2]), 0.0)

    flat = r2.reshape(N, 140)
    f1 = np.maximum(flat @ fw1.T + fb1, 0.0)
    f2 = np.maximum(f1 @ fw2.T + fb2, 0.0)       # module applies relu to fc2 too
    m = f2.max(axis=1, keepdims=True)
    lse = np.log(np.exp(f2 - m).sum(axis=1, keepdims=True)) + m
    return f2 - lse


# ---------------------------------------------------------------------------
if __name__ == "__main__":
    key = jax.random.PRNGKey(0)
    k_x, k_p = jax.random.split(key)

    N = 16
    x = jax.random.normal(k_x, (N, 1, 40), dtype=jnp.float32)  # (batch, ch=1, len=40)
    params = init_params(k_p)
    packed = pack_params(params)                 # one-time host-side weight fusion

    fwd = jax.jit(net_forward)
    out = fwd(x, packed)
    out = jax.block_until_ready(out)

    ref = np_reference(x, params)
    # bf16 matmul operands (f32 accumulation) -> relaxed tolerance vs the f32 ref.
    np.testing.assert_allclose(np.asarray(out), ref, atol=3e-2, rtol=3e-2)

    print("KERNEL_OK")
</pallas_src>

<mosaic_0001>
module attributes {stable_mosaic.version = 11 : i64} {
  func.func @_net_kernel(%arg0: i32, %arg1: memref<8x40xf32, #tpu.memory_space<vmem>>, %arg2: memref<40x512xbf16, #tpu.memory_space<vmem>>, %arg3: memref<1x512xf32, #tpu.memory_space<vmem>>, %arg4: memref<256x512xbf16, #tpu.memory_space<vmem>>, %arg5: memref<1x512xf32, #tpu.memory_space<vmem>>, %arg6: memref<256x50xbf16, #tpu.memory_space<vmem>>, %arg7: memref<1x50xf32, #tpu.memory_space<vmem>>, %arg8: memref<50x10xbf16, #tpu.memory_space<vmem>>, %arg9: memref<1x10xf32, #tpu.memory_space<vmem>>, %arg10: memref<8x10xf32, #tpu.memory_space<vmem>>) attributes {dimension_semantics = [#tpu.dimension_semantics<parallel>], iteration_bounds = array<i64: 2>, scalar_prefetch = 0 : i64, scratch_operands = 0 : i64, tpu.core_type = #tpu.core_type<tc>, window_params = [{transform_indices = @transform_0, window_bounds = array<i64: 8, 40>}, {pipeline_mode = #tpu.pipeline_mode<synchronous>, transform_indices = @transform_1, window_bounds = array<i64: 40, 512>}, {pipeline_mode = #tpu.pipeline_mode<synchronous>, transform_indices = @transform_2, window_bounds = array<i64: 1, 512>}, {pipeline_mode = #tpu.pipeline_mode<synchronous>, transform_indices = @transform_3, window_bounds = array<i64: 256, 512>}, {pipeline_mode = #tpu.pipeline_mode<synchronous>, transform_indices = @transform_4, window_bounds = array<i64: 1, 512>}, {pipeline_mode = #tpu.pipeline_mode<synchronous>, transform_indices = @transform_5, window_bounds = array<i64: 256, 50>}, {pipeline_mode = #tpu.pipeline_mode<synchronous>, transform_indices = @transform_6, window_bounds = array<i64: 1, 50>}, {pipeline_mode = #tpu.pipeline_mode<synchronous>, transform_indices = @transform_7, window_bounds = array<i64: 50, 10>}, {pipeline_mode = #tpu.pipeline_mode<synchronous>, transform_indices = @transform_8, window_bounds = array<i64: 1, 10>}, {transform_indices = @transform_9, window_bounds = array<i64: 8, 10>}]} {
    %c0 = arith.constant 0 : index
    %c0_0 = arith.constant 0 : index
    %0 = vector.load %arg1[%c0, %c0_0] : memref<8x40xf32, #tpu.memory_space<vmem>>, vector<8x40xf32>
    %1 = arith.truncf %0 : vector<8x40xf32> to vector<8x40xbf16>
    %c0_1 = arith.constant 0 : index
    %c0_2 = arith.constant 0 : index
    %2 = vector.load %arg2[%c0_1, %c0_2] : memref<40x512xbf16, #tpu.memory_space<vmem>>, vector<40x512xbf16>
    %cst = arith.constant dense<0.000000e+00> : vector<8x512xf32>
    %3 = tpu.matmul %1, %2, %cst {dimension_numbers = #tpu.dot_dimension_numbers<[1], [0], [0], [1], [0, 0, 1, 1], [], []>} : vector<8x40xbf16>, vector<40x512xbf16>, vector<8x512xf32> -> vector<8x512xf32>
    %c0_3 = arith.constant 0 : index
    %c0_4 = arith.constant 0 : index
    %4 = vector.load %arg3[%c0_3, %c0_4] : memref<1x512xf32, #tpu.memory_space<vmem>>, vector<1x512xf32>
    %5 = vector.broadcast %4 : vector<1x512xf32> to vector<8x512xf32>
    %6 = arith.addf %3, %5 : vector<8x512xf32>
    %7 = vector.extract_strided_slice %6 {offsets = [0, 0], sizes = [8, 256], strides = [1, 1]} : vector<8x512xf32> to vector<8x256xf32>
    %8 = vector.extract_strided_slice %6 {offsets = [0, 256], sizes = [8, 256], strides = [1, 1]} : vector<8x512xf32> to vector<8x256xf32>
    %9 = arith.maximumf %7, %8 : vector<8x256xf32>
    %cst_5 = arith.constant 0.000000e+00 : f32
    %10 = vector.broadcast %cst_5 : f32 to vector<8x256xf32>
    %11 = arith.maximumf %9, %10 : vector<8x256xf32>
    %12 = arith.truncf %11 : vector<8x256xf32> to vector<8x256xbf16>
    %c0_6 = arith.constant 0 : index
    %c0_7 = arith.constant 0 : index
    %13 = vector.load %arg4[%c0_6, %c0_7] : memref<256x512xbf16, #tpu.memory_space<vmem>>, vector<256x512xbf16>
    %cst_8 = arith.constant dense<0.000000e+00> : vector<8x512xf32>
    %14 = tpu.matmul %12, %13, %cst_8 {dimension_numbers = #tpu.dot_dimension_numbers<[1], [0], [0], [1], [0, 0, 1, 1], [], []>} : vector<8x256xbf16>, vector<256x512xbf16>, vector<8x512xf32> -> vector<8x512xf32>
    %c0_9 = arith.constant 0 : index
    %c0_10 = arith.constant 0 : index
    %15 = vector.load %arg5[%c0_9, %c0_10] : memref<1x512xf32, #tpu.memory_space<vmem>>, vector<1x512xf32>
    %16 = vector.broadcast %15 : vector<1x512xf32> to vector<8x512xf32>
    %17 = arith.addf %14, %16 : vector<8x512xf32>
    %18 = vector.extract_strided_slice %17 {offsets = [0, 0], sizes = [8, 256], strides = [1, 1]} : vector<8x512xf32> to vector<8x256xf32>
    %19 = vector.extract_strided_slice %17 {offsets = [0, 256], sizes = [8, 256], strides = [1, 1]} : vector<8x512xf32> to vector<8x256xf32>
    %20 = arith.maximumf %18, %19 : vector<8x256xf32>
    %cst_11 = arith.constant 0.000000e+00 : f32
    %21 = vector.broadcast %cst_11 : f32 to vector<8x256xf32>
    %22 = arith.maximumf %20, %21 : vector<8x256xf32>
    %23 = arith.truncf %22 : vector<8x256xf32> to vector<8x256xbf16>
    %c0_12 = arith.constant 0 : index
    %c0_13 = arith.constant 0 : index
    %24 = vector.load %arg6[%c0_12, %c0_13] : memref<256x50xbf16, #tpu.memory_space<vmem>>, vector<256x50xbf16>
    %cst_14 = arith.constant dense<0.000000e+00> : vector<8x50xf32>
    %25 = tpu.matmul %23, %24, %cst_14 {dimension_numbers = #tpu.dot_dimension_numbers<[1], [0], [0], [1], [0, 0, 1, 1], [], []>} : vector<8x256xbf16>, vector<256x50xbf16>, vector<8x50xf32> -> vector<8x50xf32>
    %c0_15 = arith.constant 0 : index
    %c0_16 = arith.constant 0 : index
    %26 = vector.load %arg7[%c0_15, %c0_16] : memref<1x50xf32, #tpu.memory_space<vmem>>, vector<1x50xf32>
    %27 = vector.broadcast %26 : vector<1x50xf32> to vector<8x50xf32>
    %28 = arith.addf %25, %27 : vector<8x50xf32>
    %cst_17 = arith.constant 0.000000e+00 : f32
    %29 = vector.broadcast %cst_17 : f32 to vector<8x50xf32>
    %30 = arith.maximumf %28, %29 : vector<8x50xf32>
    %31 = arith.truncf %30 : vector<8x50xf32> to vector<8x50xbf16>
    %c0_18 = arith.constant 0 : index
    %c0_19 = arith.constant 0 : index
    %32 = vector.load %arg8[%c0_18, %c0_19] : memref<50x10xbf16, #tpu.memory_space<vmem>>, vector<50x10xbf16>
    %cst_20 = arith.constant dense<0.000000e+00> : vector<8x10xf32>
    %33 = tpu.matmul %31, %32, %cst_20 {dimension_numbers = #tpu.dot_dimension_numbers<[1], [0], [0], [1], [0, 0, 1, 1], [], []>} : vector<8x50xbf16>, vector<50x10xbf16>, vector<8x10xf32> -> vector<8x10xf32>
    %c0_21 = arith.constant 0 : index
    %c0_22 = arith.constant 0 : index
    %34 = vector.load %arg9[%c0_21, %c0_22] : memref<1x10xf32, #tpu.memory_space<vmem>>, vector<1x10xf32>
    %35 = vector.broadcast %34 : vector<1x10xf32> to vector<8x10xf32>
    %36 = arith.addf %33, %35 : vector<8x10xf32>
    %cst_23 = arith.constant 0.000000e+00 : f32
    %37 = vector.broadcast %cst_23 : f32 to vector<8x10xf32>
    %38 = arith.maximumf %36, %37 : vector<8x10xf32>
    %cst_24 = arith.constant dense<0xFF800000> : vector<8xf32>
    %39 = vector.multi_reduction <maximumf>, %38, %cst_24 [1] : vector<8x10xf32> to vector<8xf32>
    %40 = vector.shape_cast %39 : vector<8xf32> to vector<8x1xf32>
    %41 = vector.broadcast %40 : vector<8x1xf32> to vector<8x10xf32>
    %42 = arith.subf %38, %41 : vector<8x10xf32>
    %43 = math.exp %42 : vector<8x10xf32>
    %cst_25 = arith.constant dense<0.000000e+00> : vector<8xf32>
    %44 = vector.multi_reduction <add>, %43, %cst_25 [1] : vector<8x10xf32> to vector<8xf32>
    %45 = vector.shape_cast %44 : vector<8xf32> to vector<8x1xf32>
    %46 = math.log %45 : vector<8x1xf32>
    %47 = arith.addf %46, %40 : vector<8x1xf32>
    %48 = vector.broadcast %47 : vector<8x1xf32> to vector<8x10xf32>
    %49 = arith.subf %38, %48 : vector<8x10xf32>
    %c0_26 = arith.constant 0 : index
    %c0_27 = arith.constant 0 : index
    %50 = vector.load %arg10[%c0_26, %c0_27] : memref<8x10xf32, #tpu.memory_space<vmem>>, vector<8x10xf32>
    tpu.vector_store %arg10[%c0_26, %c0_27], %49 {strides = array<i32>} : memref<8x10xf32, #tpu.memory_space<vmem>>, vector<8x10xf32>,
    return
  }
  func.func @transform_0(%arg0: i32) -> (i32, i32) {
    %c0_i32 = arith.constant 0 : i32
    %c0_i32_0 = arith.constant 0 : i32
    return %arg0, %c0_i32 : i32, i32
  }
  func.func @transform_1(%arg0: i32) -> (i32, i32) {
    %c0_i32 = arith.constant 0 : i32
    %c0_i32_0 = arith.constant 0 : i32
    %c0_i32_1 = arith.constant 0 : i32
    return %c0_i32, %c0_i32_0 : i32, i32
  }
  func.func @transform_2(%arg0: i32) -> (i32, i32) {
    %c0_i32 = arith.constant 0 : i32
    %c0_i32_0 = arith.constant 0 : i32
    %c0_i32_1 = arith.constant 0 : i32
    return %c0_i32, %c0_i32_0 : i32, i32
  }
  func.func @transform_3(%arg0: i32) -> (i32, i32) {
    %c0_i32 = arith.constant 0 : i32
    %c0_i32_0 = arith.constant 0 : i32
    %c0_i32_1 = arith.constant 0 : i32
    return %c0_i32, %c0_i32_0 : i32, i32
  }
  func.func @transform_4(%arg0: i32) -> (i32, i32) {
    %c0_i32 = arith.constant 0 : i32
    %c0_i32_0 = arith.constant 0 : i32
    %c0_i32_1 = arith.constant 0 : i32
    return %c0_i32, %c0_i32_0 : i32, i32
  }
  func.func @transform_5(%arg0: i32) -> (i32, i32) {
    %c0_i32 = arith.constant 0 : i32
    %c0_i32_0 = arith.constant 0 : i32
    %c0_i32_1 = arith.constant 0 : i32
    return %c0_i32, %c0_i32_0 : i32, i32
  }
  func.func @transform_6(%arg0: i32) -> (i32, i32) {
    %c0_i32 = arith.constant 0 : i32
    %c0_i32_0 = arith.constant 0 : i32
    %c0_i32_1 = arith.constant 0 : i32
    return %c0_i32, %c0_i32_0 : i32, i32
  }
  func.func @transform_7(%arg0: i32) -> (i32, i32) {
    %c0_i32 = arith.constant 0 : i32
    %c0_i32_0 = arith.constant 0 : i32
    %c0_i32_1 = arith.constant 0 : i32
    return %c0_i32, %c0_i32_0 : i32, i32
  }
  func.func @transform_8(%arg0: i32) -> (i32, i32) {
    %c0_i32 = arith.constant 0 : i32
    %c0_i32_0 = arith.constant 0 : i32
    %c0_i32_1 = arith.constant 0 : i32
    return %c0_i32, %c0_i32_0 : i32, i32
  }
  func.func @transform_9(%arg0: i32) -> (i32, i32) {
    %c0_i32 = arith.constant 0 : i32
    %c0_i32_0 = arith.constant 0 : i32
    return %arg0, %c0_i32 : i32, i32
  }
}

</mosaic_0001>

<llo_original>
// kernel: net_forward.1
$region0: #{net_forward.1}
  #allocation0 [shape = 'u32[]', space=smem, size = 0x4, offset = 0x4, fixed_abs, tag = 'smem constant byte address 0x4 - core index']
  #allocation1 [shape = 'u32[144,128]{1,0:T(1,128)}', space=vmem, size = 0x12000, scoped, tag = 'internal scratch']
  %s0 = inlined_call_operand.vmem [shape: f32[16,40], index: 0, kind: input, shape index: {}]
  %s1 = inlined_call_operand.vmem [shape: bf16[40,512], index: 1, kind: input, shape index: {}]
  %s2 = inlined_call_operand.vmem [shape: f32[1,512], index: 2, kind: input, shape index: {}]
  %s3 = inlined_call_operand.hbm [shape: bf16[256,512], index: 3, kind: input, shape index: {}]
  %s4 = inlined_call_operand.vmem [shape: f32[1,512], index: 4, kind: input, shape index: {}]
  %s5 = inlined_call_operand.vmem [shape: bf16[256,50], index: 5, kind: input, shape index: {}]
  %s6 = inlined_call_operand.vmem [shape: f32[1,50], index: 6, kind: input, shape index: {}]
  %s7 = inlined_call_operand.vmem [shape: bf16[50,10], index: 7, kind: input, shape index: {}]
  %s8 = inlined_call_operand.vmem [shape: f32[1,10], index: 8, kind: input, shape index: {}]
  %s9 = inlined_call_operand.hbm [shape: f32[16,10], index: 9, kind: output, shape index: {}]
  %s10 = sld [smem:[#allocation0]]
  $region73: #{net_forward.1} parent=0
    _
  %s12 = ssub.s32 1, %s10
  %s13 = scalar_select 0, %s12, %s10
  $region1: #{net_forward.1} parent=0
    #allocation2 [shape = 'u8[262144]{0}', space=vmem, size = 0x40000, scoped, tag = 'input window, operand 3, single buffered']
    #allocation3 [shape = 's32[2]{0}', space=sflag, size = 0x8, scoped, tag = 'scoped memory for net_forward.1']
    #allocation4 [shape = 's32[2]{0}', space=sflag, size = 0x8, scoped, tag = 'scoped memory for net_forward.1']
    #allocation5 [shape = 'u8[8192]{0}', space=vmem, size = 0x2000, scoped, tag = 'output window, operand 0']
    %14 = vsyncpa [#allocation3], 0
    %15 = vsyncpa [#allocation4], 0
    %s16 = scalar_lea.sflag [#allocation4], 1
    %17 = vsyncpa %s16, 0
    loop: start=0, step=1, limit=4
    $region2: #{net_forward.1} parent=1 // loop_pre_header
      _
    $region3: #{net_forward.1} parent=1 // loop_header
      %s19 = sphi 0, %s23
      %p20 = scmp.ge.s32.totalorder %s19, 4
      %s29 = sphi 0, %s31
      %s32 = sphi 0, %s29
      %s33 = sphi 0, %s32
      %s49 = sphi 0, %s33
      %s53 = sphi 0, %s53
      %s55 = sphi 0, %s53
      %s56 = sphi 0, %s55
      %s70 = sphi 0, %s56
      %s74 = sphi 0, %s74
      %s76 = sphi 0, %s74
      %s77 = sphi 0, %s76
      %s91 = sphi 0, %s77
      %s95 = sphi 0, %s95
      %s97 = sphi 0, %s95
      %s98 = sphi 0, %s97
      %s112 = sphi 0, %s98
      %s116 = sphi 0, %s116
      %s118 = sphi 0, %s116
      %s119 = sphi 0, %s118
      %s133 = sphi 0, %s119
      %s137 = sphi 0, %s137
      %s139 = sphi 0, %s137
      %s140 = sphi 0, %s139
      %s154 = sphi 0, %s140
      %s158 = sphi 0, %s158
      %s160 = sphi 0, %s158
      %s161 = sphi 0, %s160
      %s175 = sphi 0, %s161
      %s179 = sphi 0, %s179
      %s181 = sphi 0, %s179
      %s182 = sphi 0, %s181
      %s196 = sphi 0, %s182
      %s200 = sphi 0, %s200
      %s202 = sphi 0, %s200
      %s203 = sphi 0, %s202
      %s217 = sphi 0, %s203
      %s223 = sphi 0, %s225
      %s226 = sphi 0, %s223
      %s227 = sphi 0, %s226
      %s243 = sphi 0, %s227
    $region4: #{net_forward.1} parent=1 // loop_header_branch
      %22 = sbr.rel (%p20) target = $region8
    $region5: #{net_forward.1} parent=1 // loop_body
      %s24 = ssub.s32 %s19, 1
      %s25 = ssub.s32 %s19, 2
      %s26 = sadd.s32 %s19, 1
      %s27 = ssub.s32 %s19, %s26
      %p28 = scmp.eq.s32.totalorder %s27, 0
      %s30 = sadd.s32 %s29, 1
      %s31 = scalar_select %p28, %s29, %s30
      %p34 = pneg %p28
      %p35 = scmp.eq.s32.totalorder %s19, 1
      %p36 = por %p34, %p35
      %p37 = scmp.ne.s32.totalorder %s29, %s32
      %p38 = scmp.eq.s32.totalorder %s19, 0
      %p39 = por %p37, %p38
      %p40 = scmp.ne.s32.totalorder %s29, %s32
      %p41 = scmp.eq.s32.totalorder %s24, 1
      %p42 = por %p40, %p41
      %p43 = scmp.ne.s32.totalorder %s32, %s33
      %p44 = scmp.eq.s32.totalorder %s24, 0
      %p45 = por %p43, %p44
      %p46 = scmp.ne.s32.totalorder %s32, %s33
      %p47 = scmp.eq.s32.totalorder %s25, 1
      %p48 = por %p46, %p47
      %p50 = scmp.ne.s32.totalorder %s33, %s49
      %p51 = scmp.eq.s32.totalorder %s25, 0
      %p52 = por %p50, %p51
      %s54 = sadd.s32 %s53, 1
      %p57 = scmp.eq.s32.totalorder %s19, 1
      %p58 = scmp.ne.s32.totalorder %s53, %s55
      %p59 = scmp.eq.s32.totalorder %s19, 0
      %p60 = por %p58, %p59
      %p61 = scmp.ne.s32.totalorder %s53, %s55
      %p62 = scmp.eq.s32.totalorder %s24, 1
      %p63 = por %p61, %p62
      %p64 = scmp.ne.s32.totalorder %s55, %s56
      %p65 = scmp.eq.s32.totalorder %s24, 0
      %p66 = por %p64, %p65
      %p67 = scmp.ne.s32.totalorder %s55, %s56
      %p68 = scmp.eq.s32.totalorder %s25, 1
      %p69 = por %p67, %p68
      %p71 = scmp.ne.s32.totalorder %s56, %s70
      %p72 = scmp.eq.s32.totalorder %s25, 0
      %p73 = por %p71, %p72
      %s75 = sadd.s32 %s74, 1
      %p78 = scmp.eq.s32.totalorder %s19, 1
      %p79 = scmp.ne.s32.totalorder %s74, %s76
      %p80 = scmp.eq.s32.totalorder %s19, 0
      %p81 = por %p79, %p80
      %p82 = scmp.ne.s32.totalorder %s74, %s76
      %p83 = scmp.eq.s32.totalorder %s24, 1
      %p84 = por %p82, %p83
      %p85 = scmp.ne.s32.totalorder %s76, %s77
      %p86 = scmp.eq.s32.totalorder %s24, 0
      %p87 = por %p85, %p86
      %p88 = scmp.ne.s32.totalorder %s76, %s77
      %p89 = scmp.eq.s32.totalorder %s25, 1
      %p90 = por %p88, %p89
      %p92 = scmp.ne.s32.totalorder %s77, %s91
      %p93 = scmp.eq.s32.totalorder %s25, 0
      %p94 = por %p92, %p93
      %s96 = sadd.s32 %s95, 1
      %p99 = scmp.eq.s32.totalorder %s19, 1
      %p100 = scmp.ne.s32.totalorder %s95, %s97
      %p101 = scmp.eq.s32.totalorder %s19, 0
      %p102 = por %p100, %p101
      %p103 = scmp.ne.s32.totalorder %s95, %s97
      %p104 = scmp.eq.s32.totalorder %s24, 1
      %p105 = por %p103, %p104
      %p106 = scmp.ne.s32.totalorder %s97, %s98
      %p107 = scmp.eq.s32.totalorder %s24, 0
      %p108 = por %p106, %p107
      %p109 = scmp.ne.s32.totalorder %s97, %s98
      %p110 = scmp.eq.s32.totalorder %s25, 1
      %p111 = por %p109, %p110
      %p113 = scmp.ne.s32.totalorder %s98, %s112
      %p114 = scmp.eq.s32.totalorder %s25, 0
      %p115 = por %p113, %p114
      %s117 = sadd.s32 %s116, 1
      %p120 = scmp.eq.s32.totalorder %s19, 1
      %p121 = scmp.ne.s32.totalorder %s116, %s118
      %p122 = scmp.eq.s32.totalorder %s19, 0
      %p123 = por %p121, %p122
      %p124 = scmp.ne.s32.totalorder %s116, %s118
      %p125 = scmp.eq.s32.totalorder %s24, 1
      %p126 = por %p124, %p125
      %p127 = scmp.ne.s32.totalorder %s118, %s119
      %p128 = scmp.eq.s32.totalorder %s24, 0
      %p129 = por %p127, %p128
      %p130 = scmp.ne.s32.totalorder %s118, %s119
      %p131 = scmp.eq.s32.totalorder %s25, 1
      %p132 = por %p130, %p131
      %p134 = scmp.ne.s32.totalorder %s119, %s133
      %p135 = scmp.eq.s32.totalorder %s25, 0
      %p136 = por %p134, %p135
      %s138 = sadd.s32 %s137, 1
      %p141 = scmp.eq.s32.totalorder %s19, 1
      %p142 = scmp.ne.s32.totalorder %s137, %s139
      %p143 = scmp.eq.s32.totalorder %s19, 0
      %p144 = por %p142, %p143
      %p145 = scmp.ne.s32.totalorder %s137, %s139
      %p146 = scmp.eq.s32.totalorder %s24, 1
      %p147 = por %p145, %p146
      %p148 = scmp.ne.s32.totalorder %s139, %s140
      %p149 = scmp.eq.s32.totalorder %s24, 0
      %p150 = por %p148, %p149
      %p151 = scmp.ne.s32.totalorder %s139, %s140
      %p152 = scmp.eq.s32.totalorder %s25, 1
      %p153 = por %p151, %p152
      %p155 = scmp.ne.s32.totalorder %s140, %s154
      %p156 = scmp.eq.s32.totalorder %s25, 0
      %p157 = por %p155, %p156
      %s159 = sadd.s32 %s158, 1
      %p162 = scmp.eq.s32.totalorder %s19, 1
      %p163 = scmp.ne.s32.totalorder %s158, %s160
      %p164 = scmp.eq.s32.totalorder %s19, 0
      %p165 = por %p163, %p164
      %p166 = scmp.ne.s32.totalorder %s158, %s160
      %p167 = scmp.eq.s32.totalorder %s24, 1
      %p168 = por %p166, %p167
      %p169 = scmp.ne.s32.totalorder %s160, %s161
      %p170 = scmp.eq.s32.totalorder %s24, 0
      %p171 = por %p169, %p170
      %p172 = scmp.ne.s32.totalorder %s160, %s161
      %p173 = scmp.eq.s32.totalorder %s25, 1
      %p174 = por %p172, %p173
      %p176 = scmp.ne.s32.totalorder %s161, %s175
      %p177 = scmp.eq.s32.totalorder %s25, 0
      %p178 = por %p176, %p177
      %s180 = sadd.s32 %s179, 1
      %p183 = scmp.eq.s32.totalorder %s19, 1
      %p184 = scmp.ne.s32.totalorder %s179, %s181
      %p185 = scmp.eq.s32.totalorder %s19, 0
      %p186 = por %p184, %p185
      %p187 = scmp.ne.s32.totalorder %s179, %s181
      %p188 = scmp.eq.s32.totalorder %s24, 1
      %p189 = por %p187, %p188
      %p190 = scmp.ne.s32.totalorder %s181, %s182
      %p191 = scmp.eq.s32.totalorder %s24, 0
      %p192 = por %p190, %p191
      %p193 = scmp.ne.s32.totalorder %s181, %s182
      %p194 = scmp.eq.s32.totalorder %s25, 1
      %p195 = por %p193, %p194
      %p197 = scmp.ne.s32.totalorder %s182, %s196
      %p198 = scmp.eq.s32.totalorder %s25, 0
      %p199 = por %p197, %p198
      %s201 = sadd.s32 %s200, 1
      %p204 = scmp.eq.s32.totalorder %s19, 1
      %p205 = scmp.ne.s32.totalorder %s200, %s202
      %p206 = scmp.eq.s32.totalorder %s19, 0
      %p207 = por %p205, %p206
      %p208 = scmp.ne.s32.totalorder %s200, %s202
      %p209 = scmp.eq.s32.totalorder %s24, 1
      %p210 = por %p208, %p209
      %p211 = scmp.ne.s32.totalorder %s202, %s203
      %p212 = scmp.eq.s32.totalorder %s24, 0
      %p213 = por %p211, %p212
      %p214 = scmp.ne.s32.totalorder %s202, %s203
      %p215 = scmp.eq.s32.totalorder %s25, 1
      %p216 = por %p214, %p215
      %p218 = scmp.ne.s32.totalorder %s203, %s217
      %p219 = scmp.eq.s32.totalorder %s25, 0
      %p220 = por %p218, %p219
      %s221 = ssub.s32 %s19, %s26
      %p222 = scmp.eq.s32.totalorder %s221, 0
      %s224 = sadd.s32 %s223, 1
      %s225 = scalar_select %p222, %s223, %s224
      %p228 = pneg %p222
      %p229 = scmp.eq.s32.totalorder %s19, 1
      %p230 = por %p228, %p229
      %p231 = scmp.ne.s32.totalorder %s223, %s226
      %p232 = scmp.eq.s32.totalorder %s19, 0
      %p233 = por %p231, %p232
      %p234 = scmp.ne.s32.totalorder %s223, %s226
      %p235 = scmp.eq.s32.totalorder %s24, 1
      %p236 = por %p234, %p235
      %p237 = scmp.ne.s32.totalorder %s226, %s227
      %p238 = scmp.eq.s32.totalorder %s24, 0
      %p239 = por %p237, %p238
      %p240 = scmp.ne.s32.totalorder %s226, %s227
      %p241 = scmp.eq.s32.totalorder %s25, 1
      %p242 = por %p240, %p241
      %p244 = scmp.ne.s32.totalorder %s227, %s243
      %p245 = scmp.eq.s32.totalorder %s25, 0
      %p246 = por %p244, %p245
      %p247 = scmp.le.s32.totalorder 1, %s19
      %p248 = scmp.lt.s32.totalorder %s19, 3
      %p249 = pnand %p247, %p248
      %p250 = pneg %p249
      // Predicated region
      $region9: #{net_forward.1} parent=5 // pred_check
        _
      $region10: #{net_forward.1} parent=5 // pred_check_branch
        %252 = sbr.rel (%p249) target = $region12
      $region11: #{net_forward.1} parent=5 // pred_region
        %s253 = ssub.s32 %s19, 1
        // Predicated region
        $region13: #{net_forward.1} parent=11 // pred_check
          %p254 = pneg %p66
        $region14: #{net_forward.1} parent=11 // pred_check_branch
          %256 = sbr.rel (%p254) target = $region16
        $region15: #{net_forward.1} parent=11 // pred_region
          _
        $region16: #{net_forward.1} parent=11 // pred_fallthru
          _
        // Predicated region
        $region17: #{net_forward.1} parent=11 // pred_check
          %p257 = pneg %p87
        $region18: #{net_forward.1} parent=11 // pred_check_branch
          %259 = sbr.rel (%p257) target = $region20
        $region19: #{net_forward.1} parent=11 // pred_region
          _
        $region20: #{net_forward.1} parent=11 // pred_fallthru
          _
        // Predicated region
        $region21: #{net_forward.1} parent=11 // pred_check
          %p260 = pneg %p108
        $region22: #{net_forward.1} parent=11 // pred_check_branch
          %262 = sbr.rel (%p260) target = $region24
        $region23: #{net_forward.1} parent=11 // pred_region
          %s264 = ssub.s32 8192, 8192
          %265 = vsyncadd [#allocation3], %s264
          %s266 = sshll.u32 [#allocation2], 4
          %s267 = int_to_ptr.vmem [resolvable:$true] %s266
          %272 = dma.hbm_to_vmem [thread:$0]  %s3, 8192, %s267, [#allocation3], 256, 256, 16
        $region24: #{net_forward.1} parent=11 // pred_fallthru
          _
        // Predicated region
        $region25: #{net_forward.1} parent=11 // pred_check
          %p273 = pneg %p129
        $region26: #{net_forward.1} parent=11 // pred_check_branch
          %275 = sbr.rel (%p273) target = $region28
        $region27: #{net_forward.1} parent=11 // pred_region
          _
        $region28: #{net_forward.1} parent=11 // pred_fallthru
          _
        // Predicated region
        $region29: #{net_forward.1} parent=11 // pred_check
          %p276 = pneg %p150
        $region30: #{net_forward.1} parent=11 // pred_check_branch
          %278 = sbr.rel (%p276) target = $region32
        $region31: #{net_forward.1} parent=11 // pred_region
          _
        $region32: #{net_forward.1} parent=11 // pred_fallthru
          _
        // Predicated region
        $region33: #{net_forward.1} parent=11 // pred_check
          %p279 = pneg %p171
        $region34: #{net_forward.1} parent=11 // pred_check_branch
          %281 = sbr.rel (%p279) target = $region36
        $region35: #{net_forward.1} parent=11 // pred_region
          _
        $region36: #{net_forward.1} parent=11 // pred_fallthru
          _
        // Predicated region
        $region37: #{net_forward.1} parent=11 // pred_check
          %p282 = pneg %p192
        $region38: #{net_forward.1} parent=11 // pred_check_branch
          %284 = sbr.rel (%p282) target = $region40
        $region39: #{net_forward.1} parent=11 // pred_region
          _
        $region40: #{net_forward.1} parent=11 // pred_fallthru
          _
        // Predicated region
        $region41: #{net_forward.1} parent=11 // pred_check
          %p285 = pneg %p213
        $region42: #{net_forward.1} parent=11 // pred_check_branch
          %287 = sbr.rel (%p285) target = $region44
        $region43: #{net_forward.1} parent=11 // pred_region
          _
        $region44: #{net_forward.1} parent=11 // pred_fallthru
          _
      $region12: #{net_forward.1} parent=5 // pred_fallthru
        _
      %p288 = scmp.lt.s32.totalorder %s19, 2
      // Predicated region
      $region45: #{net_forward.1} parent=5 // pred_check
        %p289 = pneg %p288
      $region46: #{net_forward.1} parent=5 // pred_check_branch
        %291 = sbr.rel (%p289) target = $region48
      $region47: #{net_forward.1} parent=5 // pred_region
        // Predicated region
        $region49: #{net_forward.1} parent=47 // pred_check
          %p292 = pneg %p39
        $region50: #{net_forward.1} parent=47 // pred_check_branch
          %294 = sbr.rel (%p292) target = $region52
        $region51: #{net_forward.1} parent=47 // pred_region
          %p295 = scmp.lt.s32.totalorder %s19, 1
          %s296 = scalar_select %p295, %s19, 1
          %s297 = smul.addr %s296, 8
          %s298 = scalar_lea.vmem %s0, %s297
        $region52: #{net_forward.1} parent=47 // pred_fallthru
          _
      $region48: #{net_forward.1} parent=5 // pred_fallthru
        _
      %p299 = scmp.le.s32.totalorder 1, %s19
      %p300 = scmp.lt.s32.totalorder %s19, 3
      %p301 = pnand %p299, %p300
      %p302 = pneg %p301
      // Predicated region
      $region53: #{net_forward.1} parent=5 // pred_check
        _
      $region54: #{net_forward.1} parent=5 // pred_check_branch
        %304 = sbr.rel (%p301) target = $region56
      $region55: #{net_forward.1} parent=5 // pred_region
        %s305 = ssub.s32 %s19, 1
        // Predicated region
        $region57: #{net_forward.1} parent=55 // pred_check
          %p306 = pneg %p108
        $region58: #{net_forward.1} parent=55 // pred_check_branch
          %308 = sbr.rel (%p306) target = $region60
        $region59: #{net_forward.1} parent=55 // pred_region
          %309 = dma.done [#allocation3], 8192
        $region60: #{net_forward.1} parent=55 // pred_fallthru
          _
        %p310 = scmp.lt.s32.totalorder %s24, 1
        %s311 = scalar_select %p310, %s24, 1
        %s312 = smul.addr %s311, 8
        %s313 = scalar_lea.vmem %s0, %s312
        %p314 = pneg %p45
        %p315 = pneg %p42
        %p316 = pneg %p66
        %p317 = pneg %p63
        %p318 = pneg %p87
        %p319 = pneg %p84
        %p320 = pneg %p108
        %p321 = pneg %p105
        %p322 = pneg %p129
        %p323 = pneg %p126
        %p324 = pneg %p150
        %p325 = pneg %p147
        %p326 = pneg %p171
        %p327 = pneg %p168
        %p328 = pneg %p192
        %p329 = pneg %p189
        %p330 = pneg %p213
        %p331 = pneg %p210
        %p332 = pneg %p239
        %p333 = pneg %p236
        %s334 = sand.u32 %s226, 1
        %s335 = scalar_lea.sflag [#allocation4], %s334
        %s336 = sand.u32 %s226, 1
        %s337 = smul.addr %s336, 8
        %s338 = scalar_lea.vmem [#allocation5], %s337
        %p339 = scmp.lt.s32.totalorder %s24, 1
        %s340 = scalar_select %p339, %s24, 1
        %s341 = smul.addr %s340, 8
        %s342 = scalar_lea.vmem %s0, %s341
        %v344 = vld [vmem:[%s342] sm:$0xff]
        %v345 = vpack.c.bf16 %v344, %v344
        %v346 = vld [vmem:[%s1] sm:$0xff]
        %v347 = vld [vmem:[%s1 + $0x8] sm:$0xff]
        %v348 = vld [vmem:[%s1 + $0x10] sm:$0xff]
        %v349 = vld [vmem:[%s1 + $0x18] sm:$0xff]
        %v350 = vld [vmem:[%s1 + $0x20] sm:$0xff]
        %v351 = vld [vmem:[%s1 + $0x28] sm:$0xff]
        %v352 = vld [vmem:[%s1 + $0x30] sm:$0xff]
        %v353 = vld [vmem:[%s1 + $0x38] sm:$0xff]
        %v354 = vld [vmem:[%s1 + $0x40] sm:$0xff]
        %v355 = vld [vmem:[%s1 + $0x48] sm:$0xff]
        %v356 = vld [vmem:[%s2] sm:$0xf]
        %v358 = vlaneseq
        %v359 = vshrl.u32 %v358, 7
        %v360 = vsub.s32 0, %v359
        %v361 = vrot.slane %v356, %v360
        %v362 = vlaneseq
        %v363 = vshrl.u32 %v362, 7
        %v364 = vsub.s32 1, %v363
        %v365 = vrot.slane %v356, %v364
        %v366 = vlaneseq
        %v367 = vshrl.u32 %v366, 7
        %v368 = vsub.s32 2, %v367
        %v369 = vrot.slane %v356, %v368
        %v370 = vlaneseq
        %v371 = vshrl.u32 %v370, 7
        %v372 = vsub.s32 3, %v371
        %v373 = vrot.slane %v356, %v372
        %v388 = vunpack.c.l.b16 %v346
        %v389 = vunpack.c.h.b16 %v346
        %v390 = vunpack.c.l.b16 %v347
        %v391 = vunpack.c.h.b16 %v347
        %v392 = vunpack.c.l.b16 %v348
        %v393 = vunpack.c.h.b16 %v348
        %v394 = vunpack.c.l.b16 %v349
        %v395 = vunpack.c.h.b16 %v349
        %v396 = vunpack.c.l.b16 %v350
        %v397 = vunpack.c.h.b16 %v350
        %v398 = vunpack.c.l.b16 %v351
        %v399 = vunpack.c.h.b16 %v351
        %v400 = vunpack.c.l.b16 %v352
        %v401 = vunpack.c.h.b16 %v352
        %v402 = vunpack.c.l.b16 %v353
        %v403 = vunpack.c.h.b16 %v353
        %v404 = vunpack.c.l.b16 %v354
        %v405 = vunpack.c.h.b16 %v354
        %v406 = vunpack.c.l.b16 %v355
        %v407 = vunpack.c.h.b16 %v355
        %v408 = vpack.c.b16 %v392, %v388
        %v409 = vpack.c.b16 %v393, %v389
        %v410 = vpack.c.b16 %v394, %v390
        %v411 = vpack.c.b16 %v395, %v391
        %v412 = vpack.c.b16 %v400, %v396
        %v413 = vpack.c.b16 %v401, %v397
        %v414 = vpack.c.b16 %v402, %v398
        %v415 = vpack.c.b16 %v403, %v399
        %v416 = vpack.c.b16 %v404, %v404
        %v417 = vpack.c.b16 %v405, %v405
        %v418 = vpack.c.b16 %v406, %v406
        %v419 = vpack.c.b16 %v407, %v407
        %vm428 = vcmask 326656
        %v430 = vsel %vm428, %v345, 0
        %vm432 = vcmask 1043456
        %v434 = vsel %vm432, %v416, 0
        %v437 = vsel %vm432, %v417, 0
        %v440 = vsel %vm432, %v418, 0
        %v443 = vsel %vm432, %v419, 0
        %445 = vmatprep.subr.bf16.mxu0 %v409
        %446 = vmatpush1.bf16.msra.mxu0 %v408
        %447 = vmatprep.subr.bf16.mxu0 %v413
        %448 = vmatpush1.bf16.msra.mxu0 %v412
        %449 = vmatprep.subr.bf16.mxu0 %v437
        %450 = vmatpush1.bf16.msra.mxu0 %v434
        %451 = vmatprep.subr.bf16.mxu0 0
        %452 = vmatpush1.bf16.msra.mxu0 0
        %453 = vmatprep.subr.bf16.mxu0 0
        %454 = vmatpush1.bf16.msra.mxu0 0
        %455 = vmatprep.subr.bf16.mxu0 0
        %456 = vmatpush1.bf16.msra.mxu0 0
        %457 = vmatprep.subr.bf16.mxu0 0
        %458 = vmatpush1.bf16.msra.mxu0 0
        %459 = vmatprep.subr.bf16.mxu0 0
        %460 = vmatpush1.bf16.msra.mxu0 0
        %461 = vmatprep.subr.bf16.mxu0 0
        %462 = vmatpush1.bf16.msra.mxu0 0
        %463 = vmatprep.subr.bf16.mxu0 0
        %464 = vmatpush1.bf16.msra.mxu0 0
        %465 = vmatprep.subr.bf16.mxu0 0
        %466 = vmatpush1.bf16.msra.mxu0 0
        %467 = vmatprep.subr.bf16.mxu0 0
        %468 = vmatpush1.bf16.msra.mxu0 0
        %469 = vmatprep.subr.bf16.mxu0 0
        %470 = vmatpush1.bf16.msra.mxu0 0
        %471 = vmatprep.subr.bf16.mxu0 0
        %472 = vmatpush1.bf16.msra.mxu0 0
        %473 = vmatprep.subr.bf16.mxu0 0
        %474 = vmatpush1.bf16.msra.mxu0 0
        %475 = vmatprep.subr.bf16.mxu0 0
        %476 = vmatpush1.bf16.msra.mxu0 0
        %477 = vmatprep.mubr.bf16.mxu0 0
        %478 = vmatmul.mubr.bf16.gmra.mrb[0].mxu0 %v430
        %v479 = vpop.f32.mrb[0].mxu0
        %v480 = vadd.f32 %v361, %v479
        %v481 = vpop.f32.mrb[0].mxu0
        %v482 = vadd.f32 %v365, %v481
        %v483 = vpop.f32.mrb[0].mxu0
        %v484 = vpop.f32.mrb[0].mxu0
        %485 = vdwg.mxu0
        %486 = vmatprep.subr.bf16.mxu0 %v411
        %487 = vmatpush1.bf16.msra.mxu0 %v410
        %488 = vmatprep.subr.bf16.mxu0 %v415
        %489 = vmatpush1.bf16.msra.mxu0 %v414
        %490 = vmatprep.subr.bf16.mxu0 %v443
        %491 = vmatpush1.bf16.msra.mxu0 %v440
        %492 = vmatprep.subr.bf16.mxu0 0
        %493 = vmatpush1.bf16.msra.mxu0 0
        %494 = vmatprep.subr.bf16.mxu0 0
        %495 = vmatpush1.bf16.msra.mxu0 0
        %496 = vmatprep.subr.bf16.mxu0 0
        %497 = vmatpush1.bf16.msra.mxu0 0
        %498 = vmatprep.subr.bf16.mxu0 0
        %499 = vmatpush1.bf16.msra.mxu0 0
        %500 = vmatprep.subr.bf16.mxu0 0
        %501 = vmatpush1.bf16.msra.mxu0 0
        %502 = vmatprep.subr.bf16.mxu0 0
        %503 = vmatpush1.bf16.msra.mxu0 0
        %504 = vmatprep.subr.bf16.mxu0 0
        %505 = vmatpush1.bf16.msra.mxu0 0
        %506 = vmatprep.subr.bf16.mxu0 0
        %507 = vmatpush1.bf16.msra.mxu0 0
        %508 = vmatprep.subr.bf16.mxu0 0
        %509 = vmatpush1.bf16.msra.mxu0 0
        %510 = vmatprep.subr.bf16.mxu0 0
        %511 = vmatpush1.bf16.msra.mxu0 0
        %512 = vmatprep.subr.bf16.mxu0 0
        %513 = vmatpush1.bf16.msra.mxu0 0
        %514 = vmatprep.subr.bf16.mxu0 0
        %515 = vmatpush1.bf16.msra.mxu0 0
        %516 = vmatprep.subr.bf16.mxu0 0
        %517 = vmatpush1.bf16.msra.mxu0 0
        %518 = vmatprep.mubr.bf16.mxu0 0
        %519 = vmatmul.mubr.bf16.gmra.mrb[0].mxu0 %v430
        %v520 = vpop.f32.mrb[0].mxu0
        %v521 = vadd.f32 %v369, %v520
        %v522 = vpop.f32.mrb[0].mxu0
        %v523 = vadd.f32 %v373, %v522
        %v524 = vpop.f32.mrb[0].mxu0
        %v525 = vpop.f32.mrb[0].mxu0
        %526 = vdwg.mxu0
        %v527 = vmax.f32 %v480, %v521
        %v528 = vmax.f32 %v482, %v523
        %v529 = vmax.f32 %v527, 0.0
        %v530 = vmax.f32 %v528, 0.0
        %v531 = vpack.c.bf16 %v529, %v529
        %v532 = vpack.c.bf16 %v530, %v530
        %v533 = vld [vmem:[#allocation2] sm:$0xff]
        %v534 = vld [vmem:[#allocation2 + $0x8] sm:$0xff]
        %v535 = vld [vmem:[#allocation2 + $0x10] sm:$0xff]
        %v536 = vld [vmem:[#allocation2 + $0x18] sm:$0xff]
        %v537 = vld [vmem:[#allocation2 + $0x20] sm:$0xff]
        %v538 = vld [vmem:[#allocation2 + $0x28] sm:$0xff]
        %v539 = vld [vmem:[#allocation2 + $0x30] sm:$0xff]
        %v540 = vld [vmem:[#allocation2 + $0x38] sm:$0xff]
        %v541 = vld [vmem:[#allocation2 + $0x40] sm:$0xff]
        %v542 = vld [vmem:[#allocation2 + $0x48] sm:$0xff]
        %v543 = vld [vmem:[#allocation2 + $0x50] sm:$0xff]
        %v544 = vld [vmem:[#allocation2 + $0x58] sm:$0xff]
        %v545 = vld [vmem:[#allocation2 + $0x60] sm:$0xff]
        %v546 = vld [vmem:[#allocation2 + $0x68] sm:$0xff]
        %v547 = vld [vmem:[#allocation2 + $0x70] sm:$0xff]
        %v548 = vld [vmem:[#allocation2 + $0x78] sm:$0xff]
        %v549 = vld [vmem:[#allocation2 + $0x80] sm:$0xff]
        %v550 = vld [vmem:[#allocation2 + $0x88] sm:$0xff]
        %v551 = vld [vmem:[#allocation2 + $0x90] sm:$0xff]
        %v552 = vld [vmem:[#allocation2 + $0x98] sm:$0xff]
        %v553 = vld [vmem:[#allocation2 + $0xa0] sm:$0xff]
        %v554 = vld [vmem:[#allocation2 + $0xa8] sm:$0xff]
        %v555 = vld [vmem:[#allocation2 + $0xb0] sm:$0xff]
        %v556 = vld [vmem:[#allocation2 + $0xb8] sm:$0xff]
        %v557 = vld [vmem:[#allocation2 + $0xc0] sm:$0xff]
        %v558 = vld [vmem:[#allocation2 + $0xc8] sm:$0xff]
        %v559 = vld [vmem:[#allocation2 + $0xd0] sm:$0xff]
        %v560 = vld [vmem:[#allocation2 + $0xd8] sm:$0xff]
        %v561 = vld [vmem:[#allocation2 + $0xe0] sm:$0xff]
        %v562 = vld [vmem:[#allocation2 + $0xe8] sm:$0xff]
        %v563 = vld [vmem:[#allocation2 + $0xf0] sm:$0xff]
        %v564 = vld [vmem:[#allocation2 + $0xf8] sm:$0xff]
        %v565 = vld [vmem:[#allocation2 + $0x100] sm:$0xff]
        %v566 = vld [vmem:[#allocation2 + $0x108] sm:$0xff]
        %v567 = vld [vmem:[#allocation2 + $0x110] sm:$0xff]
        %v568 = vld [vmem:[#allocation2 + $0x118] sm:$0xff]
        %v569 = vld [vmem:[#allocation2 + $0x120] sm:$0xff]
        %v570 = vld [vmem:[#allocation2 + $0x128] sm:$0xff]
        %v571 = vld [vmem:[#allocation2 + $0x130] sm:$0xff]
        %v572 = vld [vmem:[#allocation2 + $0x138] sm:$0xff]
        %v573 = vld [vmem:[#allocation2 + $0x140] sm:$0xff]
        %v574 = vld [vmem:[#allocation2 + $0x148] sm:$0xff]
        %v575 = vld [vmem:[#allocation2 + $0x150] sm:$0xff]
        %v576 = vld [vmem:[#allocation2 + $0x158] sm:$0xff]
        %v577 = vld [vmem:[#allocation2 + $0x160] sm:$0xff]
        %v578 = vld [vmem:[#allocation2 + $0x168] sm:$0xff]
        %v579 = vld [vmem:[#allocation2 + $0x170] sm:$0xff]
        %v580 = vld [vmem:[#allocation2 + $0x178] sm:$0xff]
        %v581 = vld [vmem:[#allocation2 + $0x180] sm:$0xff]
        %v582 = vld [vmem:[#allocation2 + $0x188] sm:$0xff]
        %v583 = vld [vmem:[#allocation2 + $0x190] sm:$0xff]
        %v584 = vld [vmem:[#allocation2 + $0x198] sm:$0xff]
        %v585 = vld [vmem:[#allocation2 + $0x1a0] sm:$0xff]
        %v586 = vld [vmem:[#allocation2 + $0x1a8] sm:$0xff]
        %v587 = vld [vmem:[#allocation2 + $0x1b0] sm:$0xff]
        %v588 = vld [vmem:[#allocation2 + $0x1b8] sm:$0xff]
        %v589 = vld [vmem:[#allocation2 + $0x1c0] sm:$0xff]
        %v590 = vld [vmem:[#allocation2 + $0x1c8] sm:$0xff]
        %v591 = vld [vmem:[#allocation2 + $0x1d0] sm:$0xff]
        %v592 = vld [vmem:[#allocation2 + $0x1d8] sm:$0xff]
        %v593 = vld [vmem:[#allocation2 + $0x1e0] sm:$0xff]
        %v594 = vld [vmem:[#allocation2 + $0x1e8] sm:$0xff]
        %v595 = vld [vmem:[#allocation2 + $0x1f0] sm:$0xff]
        %v596 = vld [vmem:[#allocation2 + $0x1f8] sm:$0xff]
        %v597 = vld [vmem:[%s4] sm:$0xf]
        %v599 = vlaneseq
        %v600 = vshrl.u32 %v599, 7
        %v601 = vsub.s32 0, %v600
        %v602 = vrot.slane %v597, %v601
        %v603 = vlaneseq
        %v604 = vshrl.u32 %v603, 7
        %v605 = vsub.s32 1, %v604
        %v606 = vrot.slane %v597, %v605
        %v607 = vlaneseq
        %v608 = vshrl.u32 %v607, 7
        %v609 = vsub.s32 2, %v608
        %v610 = vrot.slane %v597, %v609
        %v611 = vlaneseq
        %v612 = vshrl.u32 %v611, 7
        %v613 = vsub.s32 3, %v612
        %v614 = vrot.slane %v597, %v613
        %v683 = vunpack.c.l.b16 %v533
        %v684 = vunpack.c.h.b16 %v533
        %v685 = vunpack.c.l.b16 %v534
        %v686 = vunpack.c.h.b16 %v534
        %v687 = vunpack.c.l.b16 %v535
        %v688 = vunpack.c.h.b16 %v535
        %v689 = vunpack.c.l.b16 %v536
        %v690 = vunpack.c.h.b16 %v536
        %v691 = vunpack.c.l.b16 %v537
        %v692 = vunpack.c.h.b16 %v537
        %v693 = vunpack.c.l.b16 %v538
        %v694 = vunpack.c.h.b16 %v538
        %v695 = vunpack.c.l.b16 %v539
        %v696 = vunpack.c.h.b16 %v539
        %v697 = vunpack.c.l.b16 %v540
        %v698 = vunpack.c.h.b16 %v540
        %v699 = vunpack.c.l.b16 %v541
        %v700 = vunpack.c.h.b16 %v541
        %v701 = vunpack.c.l.b16 %v542
        %v702 = vunpack.c.h.b16 %v542
        %v703 = vunpack.c.l.b16 %v543
        %v704 = vunpack.c.h.b16 %v543
        %v705 = vunpack.c.l.b16 %v544
        %v706 = vunpack.c.h.b16 %v544
        %v707 = vunpack.c.l.b16 %v545
        %v708 = vunpack.c.h.b16 %v545
        %v709 = vunpack.c.l.b16 %v546
        %v710 = vunpack.c.h.b16 %v546
        %v711 = vunpack.c.l.b16 %v547
        %v712 = vunpack.c.h.b16 %v547
        %v713 = vunpack.c.l.b16 %v548
        %v714 = vunpack.c.h.b16 %v548
        %v715 = vunpack.c.l.b16 %v549
        %v716 = vunpack.c.h.b16 %v549
        %v717 = vunpack.c.l.b16 %v550
        %v718 = vunpack.c.h.b16 %v550
        %v719 = vunpack.c.l.b16 %v551
        %v720 = vunpack.c.h.b16 %v551
        %v721 = vunpack.c.l.b16 %v552
        %v722 = vunpack.c.h.b16 %v552
        %v723 = vunpack.c.l.b16 %v553
        %v724 = vunpack.c.h.b16 %v553
        %v725 = vunpack.c.l.b16 %v554
        %v726 = vunpack.c.h.b16 %v554
        %v727 = vunpack.c.l.b16 %v555
        %v728 = vunpack.c.h.b16 %v555
        %v729 = vunpack.c.l.b16 %v556
        %v730 = vunpack.c.h.b16 %v556
        %v731 = vunpack.c.l.b16 %v557
        %v732 = vunpack.c.h.b16 %v557
        %v733 = vunpack.c.l.b16 %v558
        %v734 = vunpack.c.h.b16 %v558
        %v735 = vunpack.c.l.b16 %v559
        %v736 = vunpack.c.h.b16 %v559
        %v737 = vunpack.c.l.b16 %v560
        %v738 = vunpack.c.h.b16 %v560
        %v739 = vunpack.c.l.b16 %v561
        %v740 = vunpack.c.h.b16 %v561
        %v741 = vunpack.c.l.b16 %v562
        %v742 = vunpack.c.h.b16 %v562
        %v743 = vunpack.c.l.b16 %v563
        %v744 = vunpack.c.h.b16 %v563
        %v745 = vunpack.c.l.b16 %v564
        %v746 = vunpack.c.h.b16 %v564
        %v747 = vunpack.c.l.b16 %v565
        %v748 = vunpack.c.h.b16 %v565
        %v749 = vunpack.c.l.b16 %v566
        %v750 = vunpack.c.h.b16 %v566
        %v751 = vunpack.c.l.b16 %v567
        %v752 = vunpack.c.h.b16 %v567
        %v753 = vunpack.c.l.b16 %v568
        %v754 = vunpack.c.h.b16 %v568
        %v755 = vunpack.c.l.b16 %v569
        %v756 = vunpack.c.h.b16 %v569
        %v757 = vunpack.c.l.b16 %v570
        %v758 = vunpack.c.h.b16 %v570
        %v759 = vunpack.c.l.b16 %v571
        %v760 = vunpack.c.h.b16 %v571
        %v761 = vunpack.c.l.b16 %v572
        %v762 = vunpack.c.h.b16 %v572
        %v763 = vunpack.c.l.b16 %v573
        %v764 = vunpack.c.h.b16 %v573
        %v765 = vunpack.c.l.b16 %v574
        %v766 = vunpack.c.h.b16 %v574
        %v767 = vunpack.c.l.b16 %v575
        %v768 = vunpack.c.h.b16 %v575
        %v769 = vunpack.c.l.b16 %v576
        %v770 = vunpack.c.h.b16 %v576
        %v771 = vunpack.c.l.b16 %v577
        %v772 = vunpack.c.h.b16 %v577
        %v773 = vunpack.c.l.b16 %v578
        %v774 = vunpack.c.h.b16 %v578
        %v775 = vunpack.c.l.b16 %v579
        %v776 = vunpack.c.h.b16 %v579
        %v777 = vunpack.c.l.b16 %v580
        %v778 = vunpack.c.h.b16 %v580
        %v779 = vunpack.c.l.b16 %v581
        %v780 = vunpack.c.h.b16 %v581
        %v781 = vunpack.c.l.b16 %v582
        %v782 = vunpack.c.h.b16 %v582
        %v783 = vunpack.c.l.b16 %v583
        %v784 = vunpack.c.h.b16 %v583
        %v785 = vunpack.c.l.b16 %v584
        %v786 = vunpack.c.h.b16 %v584
        %v787 = vunpack.c.l.b16 %v585
        %v788 = vunpack.c.h.b16 %v585
        %v789 = vunpack.c.l.b16 %v586
        %v790 = vunpack.c.h.b16 %v586
        %v791 = vunpack.c.l.b16 %v587
        %v792 = vunpack.c.h.b16 %v587
        %v793 = vunpack.c.l.b16 %v588
        %v794 = vunpack.c.h.b16 %v588
        %v795 = vunpack.c.l.b16 %v589
        %v796 = vunpack.c.h.b16 %v589
        %v797 = vunpack.c.l.b16 %v590
        %v798 = vunpack.c.h.b16 %v590
        %v799 = vunpack.c.l.b16 %v591
        %v800 = vunpack.c.h.b16 %v591
        %v801 = vunpack.c.l.b16 %v592
        %v802 = vunpack.c.h.b16 %v592
        %v803 = vunpack.c.l.b16 %v593
        %v804 = vunpack.c.h.b16 %v593
        %v805 = vunpack.c.l.b16 %v594
        %v806 = vunpack.c.h.b16 %v594
        %v807 = vunpack.c.l.b16 %v595
        %v808 = vunpack.c.h.b16 %v595
        %v809 = vunpack.c.l.b16 %v596
        %v810 = vunpack.c.h.b16 %v596
        %v811 = vpack.c.b16 %v687, %v683
        %v812 = vpack.c.b16 %v688, %v684
        %v813 = vpack.c.b16 %v689, %v685
        %v814 = vpack.c.b16 %v690, %v686
        %v815 = vpack.c.b16 %v695, %v691
        %v816 = vpack.c.b16 %v696, %v692
        %v817 = vpack.c.b16 %v697, %v693
        %v818 = vpack.c.b16 %v698, %v694
        %v819 = vpack.c.b16 %v703, %v699
        %v820 = vpack.c.b16 %v704, %v700
        %v821 = vpack.c.b16 %v705, %v701
        %v822 = vpack.c.b16 %v706, %v702
        %v823 = vpack.c.b16 %v711, %v707
        %v824 = vpack.c.b16 %v712, %v708
        %v825 = vpack.c.b16 %v713, %v709
        %v826 = vpack.c.b16 %v714, %v710
        %v827 = vpack.c.b16 %v719, %v715
        %v828 = vpack.c.b16 %v720, %v716
        %v829 = vpack.c.b16 %v721, %v717
        %v830 = vpack.c.b16 %v722, %v718
        %v831 = vpack.c.b16 %v727, %v723
        %v832 = vpack.c.b16 %v728, %v724
        %v833 = vpack.c.b16 %v729, %v725
        %v834 = vpack.c.b16 %v730, %v726
        %v835 = vpack.c.b16 %v735, %v731
        %v836 = vpack.c.b16 %v736, %v732
        %v837 = vpack.c.b16 %v737, %v733
        %v838 = vpack.c.b16 %v738, %v734
        %v839 = vpack.c.b16 %v743, %v739
        %v840 = vpack.c.b16 %v744, %v740
        %v841 = vpack.c.b16 %v745, %v741
        %v842 = vpack.c.b16 %v746, %v742
        %v843 = vpack.c.b16 %v751, %v747
        %v844 = vpack.c.b16 %v752, %v748
        %v845 = vpack.c.b16 %v753, %v749
        %v846 = vpack.c.b16 %v754, %v750
        %v847 = vpack.c.b16 %v759, %v755
        %v848 = vpack.c.b16 %v760, %v756
        %v849 = vpack.c.b16 %v761, %v757
        %v850 = vpack.c.b16 %v762, %v758
        %v851 = vpack.c.b16 %v767, %v763
        %v852 = vpack.c.b16 %v768, %v764
        %v853 = vpack.c.b16 %v769, %v765
        %v854 = vpack.c.b16 %v770, %v766
        %v855 = vpack.c.b16 %v775, %v771
        %v856 = vpack.c.b16 %v776, %v772
        %v857 = vpack.c.b16 %v777, %v773
        %v858 = vpack.c.b16 %v778, %v774
        %v859 = vpack.c.b16 %v783, %v779
        %v860 = vpack.c.b16 %v784, %v780
        %v861 = vpack.c.b16 %v785, %v781
        %v862 = vpack.c.b16 %v786, %v782
        %v863 = vpack.c.b16 %v791, %v787
        %v864 = vpack.c.b16 %v792, %v788
        %v865 = vpack.c.b16 %v793, %v789
        %v866 = vpack.c.b16 %v794, %v790
        %v867 = vpack.c.b16 %v799, %v795
        %v868 = vpack.c.b16 %v800, %v796
        %v869 = vpack.c.b16 %v801, %v797
        %v870 = vpack.c.b16 %v802, %v798
        %v871 = vpack.c.b16 %v807, %v803
        %v872 = vpack.c.b16 %v808, %v804
        %v873 = vpack.c.b16 %v809, %v805
        %v874 = vpack.c.b16 %v810, %v806
        %939 = vmatprep.subr.bf16.mxu0 %v812
        %940 = vmatpush1.bf16.msra.mxu0 %v811
        %941 = vmatprep.subr.bf16.mxu0 %v816
        %942 = vmatpush1.bf16.msra.mxu0 %v815
        %943 = vmatprep.subr.bf16.mxu0 %v820
        %944 = vmatpush1.bf16.msra.mxu0 %v819
        %945 = vmatprep.subr.bf16.mxu0 %v824
        %946 = vmatpush1.bf16.msra.mxu0 %v823
        %947 = vmatprep.subr.bf16.mxu0 %v828
        %948 = vmatpush1.bf16.msra.mxu0 %v827
        %949 = vmatprep.subr.bf16.mxu0 %v832
        %950 = vmatpush1.bf16.msra.mxu0 %v831
        %951 = vmatprep.subr.bf16.mxu0 %v836
        %952 = vmatpush1.bf16.msra.mxu0 %v835
        %953 = vmatprep.subr.bf16.mxu0 %v840
        %954 = vmatpush1.bf16.msra.mxu0 %v839
        %955 = vmatprep.subr.bf16.mxu0 %v844
        %956 = vmatpush1.bf16.msra.mxu0 %v843
        %957 = vmatprep.subr.bf16.mxu0 %v848
        %958 = vmatpush1.bf16.msra.mxu0 %v847
        %959 = vmatprep.subr.bf16.mxu0 %v852
        %960 = vmatpush1.bf16.msra.mxu0 %v851
        %961 = vmatprep.subr.bf16.mxu0 %v856
        %962 = vmatpush1.bf16.msra.mxu0 %v855
        %963 = vmatprep.subr.bf16.mxu0 %v860
        %964 = vmatpush1.bf16.msra.mxu0 %v859
        %965 = vmatprep.subr.bf16.mxu0 %v864
        %966 = vmatpush1.bf16.msra.mxu0 %v863
        %967 = vmatprep.subr.bf16.mxu0 %v868
        %968 = vmatpush1.bf16.msra.mxu0 %v867
        %969 = vmatprep.subr.bf16.mxu0 %v872
        %970 = vmatpush1.bf16.msra.mxu0 %v871
        %971 = vmatprep.mubr.bf16.mxu0 %v532
        %972 = vmatmul.mubr.bf16.gmra.mrb[0].mxu0 %v531
        %v973 = vpop.f32.mrb[0].mxu0
        %v974 = vadd.f32 %v602, %v973
        %v975 = vpop.f32.mrb[0].mxu0
        %v976 = vadd.f32 %v606, %v975
        %v977 = vpop.f32.mrb[0].mxu0
        %v978 = vpop.f32.mrb[0].mxu0
        %979 = vdwg.mxu0
        %980 = vmatprep.subr.bf16.mxu0 %v814
        %981 = vmatpush1.bf16.msra.mxu0 %v813
        %982 = vmatprep.subr.bf16.mxu0 %v818
        %983 = vmatpush1.bf16.msra.mxu0 %v817
        %984 = vmatprep.subr.bf16.mxu0 %v822
        %985 = vmatpush1.bf16.msra.mxu0 %v821
        %986 = vmatprep.subr.bf16.mxu0 %v826
        %987 = vmatpush1.bf16.msra.mxu0 %v825
        %988 = vmatprep.subr.bf16.mxu0 %v830
        %989 = vmatpush1.bf16.msra.mxu0 %v829
        %990 = vmatprep.subr.bf16.mxu0 %v834
        %991 = vmatpush1.bf16.msra.mxu0 %v833
        %992 = vmatprep.subr.bf16.mxu0 %v838
        %993 = vmatpush1.bf16.msra.mxu0 %v837
        %994 = vmatprep.subr.bf16.mxu0 %v842
        %995 = vmatpush1.bf16.msra.mxu0 %v841
        %996 = vmatprep.subr.bf16.mxu0 %v846
        %997 = vmatpush1.bf16.msra.mxu0 %v845
        %998 = vmatprep.subr.bf16.mxu0 %v850
        %999 = vmatpush1.bf16.msra.mxu0 %v849
        %1000 = vmatprep.subr.bf16.mxu0 %v854
        %1001 = vmatpush1.bf16.msra.mxu0 %v853
        %1002 = vmatprep.subr.bf16.mxu0 %v858
        %1003 = vmatpush1.bf16.msra.mxu0 %v857
        %1004 = vmatprep.subr.bf16.mxu0 %v862
        %1005 = vmatpush1.bf16.msra.mxu0 %v861
        %1006 = vmatprep.subr.bf16.mxu0 %v866
        %1007 = vmatpush1.bf16.msra.mxu0 %v865
        %1008 = vmatprep.subr.bf16.mxu0 %v870
        %1009 = vmatpush1.bf16.msra.mxu0 %v869
        %1010 = vmatprep.subr.bf16.mxu0 %v874
        %1011 = vmatpush1.bf16.msra.mxu0 %v873
        %1012 = vmatprep.mubr.bf16.mxu0 %v532
        %1013 = vmatmul.mubr.bf16.gmra.mrb[0].mxu0 %v531
        %v1014 = vpop.f32.mrb[0].mxu0
        %v1015 = vadd.f32 %v610, %v1014
        %v1016 = vpop.f32.mrb[0].mxu0
        %v1017 = vadd.f32 %v614, %v1016
        %v1018 = vpop.f32.mrb[0].mxu0
        %v1019 = vpop.f32.mrb[0].mxu0
        %1020 = vdwg.mxu0
        %v1021 = vmax.f32 %v974, %v1015
        %v1022 = vmax.f32 %v976, %v1017
        %v1023 = vmax.f32 %v1021, 0.0
        %v1024 = vmax.f32 %v1022, 0.0
        %v1025 = vpack.c.bf16 %v1023, %v1023
        %v1026 = vpack.c.bf16 %v1024, %v1024
        %v1027 = vld [vmem:[%s5] sm:$0xf]
        %v1028 = vld [vmem:[%s5 + $0x4] sm:$0xf]
        %v1029 = vld [vmem:[%s5 + $0x8] sm:$0xf]
        %v1030 = vld [vmem:[%s5 + $0xc] sm:$0xf]
        %v1031 = vld [vmem:[%s5 + $0x10] sm:$0xf]
        %v1032 = vld [vmem:[%s5 + $0x14] sm:$0xf]
        %v1033 = vld [vmem:[%s5 + $0x18] sm:$0xf]
        %v1034 = vld [vmem:[%s5 + $0x1c] sm:$0xf]
        %v1035 = vld [vmem:[%s5 + $0x20] sm:$0xf]
        %v1036 = vld [vmem:[%s5 + $0x24] sm:$0xf]
        %v1037 = vld [vmem:[%s5 + $0x28] sm:$0xf]
        %v1038 = vld [vmem:[%s5 + $0x2c] sm:$0xf]
        %v1039 = vld [vmem:[%s5 + $0x30] sm:$0xf]
        %v1040 = vld [vmem:[%s5 + $0x34] sm:$0xf]
        %v1041 = vld [vmem:[%s5 + $0x38] sm:$0xf]
        %v1042 = vld [vmem:[%s5 + $0x3c] sm:$0xf]
        %v1043 = vld [vmem:[%s5 + $0x40] sm:$0xf]
        %v1044 = vld [vmem:[%s5 + $0x44] sm:$0xf]
        %v1045 = vld [vmem:[%s5 + $0x48] sm:$0xf]
        %v1046 = vld [vmem:[%s5 + $0x4c] sm:$0xf]
        %v1047 = vld [vmem:[%s5 + $0x50] sm:$0xf]
        %v1048 = vld [vmem:[%s5 + $0x54] sm:$0xf]
        %v1049 = vld [vmem:[%s5 + $0x58] sm:$0xf]
        %v1050 = vld [vmem:[%s5 + $0x5c] sm:$0xf]
        %v1051 = vld [vmem:[%s5 + $0x60] sm:$0xf]
        %v1052 = vld [vmem:[%s5 + $0x64] sm:$0xf]
        %v1053 = vld [vmem:[%s5 + $0x68] sm:$0xf]
        %v1054 = vld [vmem:[%s5 + $0x6c] sm:$0xf]
        %v1055 = vld [vmem:[%s5 + $0x70] sm:$0xf]
        %v1056 = vld [vmem:[%s5 + $0x74] sm:$0xf]
        %v1057 = vld [vmem:[%s5 + $0x78] sm:$0xf]
        %v1058 = vld [vmem:[%s5 + $0x7c] sm:$0xf]
        %v1059 = vld [vmem:[%s6] sm:$0x1]
        %v1061 = vlaneseq
        %v1062 = vshrl.u32 %v1061, 7
        %v1063 = vsub.s32 0, %v1062
        %v1064 = vrot.slane %v1059, %v1063
        %v1098 = vunpack.c.l.b16 %v1027
        %v1099 = vunpack.c.l.b16 %v1028
        %v1100 = vunpack.c.l.b16 %v1029
        %v1101 = vunpack.c.l.b16 %v1030
        %v1102 = vunpack.c.l.b16 %v1031
        %v1103 = vunpack.c.l.b16 %v1032
        %v1104 = vunpack.c.l.b16 %v1033
        %v1105 = vunpack.c.l.b16 %v1034
        %v1106 = vunpack.c.l.b16 %v1035
        %v1107 = vunpack.c.l.b16 %v1036
        %v1108 = vunpack.c.l.b16 %v1037
        %v1109 = vunpack.c.l.b16 %v1038
        %v1110 = vunpack.c.l.b16 %v1039
        %v1111 = vunpack.c.l.b16 %v1040
        %v1112 = vunpack.c.l.b16 %v1041
        %v1113 = vunpack.c.l.b16 %v1042
        %v1114 = vunpack.c.l.b16 %v1043
        %v1115 = vunpack.c.l.b16 %v1044
        %v1116 = vunpack.c.l.b16 %v1045
        %v1117 = vunpack.c.l.b16 %v1046
        %v1118 = vunpack.c.l.b16 %v1047
        %v1119 = vunpack.c.l.b16 %v1048
        %v1120 = vunpack.c.l.b16 %v1049
        %v1121 = vunpack.c.l.b16 %v1050
        %v1122 = vunpack.c.l.b16 %v1051
        %v1123 = vunpack.c.l.b16 %v1052
        %v1124 = vunpack.c.l.b16 %v1053
        %v1125 = vunpack.c.l.b16 %v1054
        %v1126 = vunpack.c.l.b16 %v1055
        %v1127 = vunpack.c.l.b16 %v1056
        %v1128 = vunpack.c.l.b16 %v1057
        %v1129 = vunpack.c.l.b16 %v1058
        %v1130 = vpack.c.b16 %v1099, %v1098
        %v1131 = vpack.c.b16 %v1101, %v1100
        %v1132 = vpack.c.b16 %v1103, %v1102
        %v1133 = vpack.c.b16 %v1105, %v1104
        %v1134 = vpack.c.b16 %v1107, %v1106
        %v1135 = vpack.c.b16 %v1109, %v1108
        %v1136 = vpack.c.b16 %v1111, %v1110
        %v1137 = vpack.c.b16 %v1113, %v1112
        %v1138 = vpack.c.b16 %v1115, %v1114
        %v1139 = vpack.c.b16 %v1117, %v1116
        %v1140 = vpack.c.b16 %v1119, %v1118
        %v1141 = vpack.c.b16 %v1121, %v1120
        %v1142 = vpack.c.b16 %v1123, %v1122
        %v1143 = vpack.c.b16 %v1125, %v1124
        %v1144 = vpack.c.b16 %v1127, %v1126
        %v1145 = vpack.c.b16 %v1129, %v1128
        %1162 = vmatprep.subr.bf16.mxu0 0
        %1163 = vmatpush1.bf16.msra.mxu0 %v1130
        %1164 = vmatprep.subr.bf16.mxu0 0
        %1165 = vmatpush1.bf16.msra.mxu0 %v1131
        %1166 = vmatprep.subr.bf16.mxu0 0
        %1167 = vmatpush1.bf16.msra.mxu0 %v1132
        %1168 = vmatprep.subr.bf16.mxu0 0
        %1169 = vmatpush1.bf16.msra.mxu0 %v1133
        %1170 = vmatprep.subr.bf16.mxu0 0
        %1171 = vmatpush1.bf16.msra.mxu0 %v1134
        %1172 = vmatprep.subr.bf16.mxu0 0
        %1173 = vmatpush1.bf16.msra.mxu0 %v1135
        %1174 = vmatprep.subr.bf16.mxu0 0
        %1175 = vmatpush1.bf16.msra.mxu0 %v1136
        %1176 = vmatprep.subr.bf16.mxu0 0
        %1177 = vmatpush1.bf16.msra.mxu0 %v1137
        %1178 = vmatprep.subr.bf16.mxu0 0
        %1179 = vmatpush1.bf16.msra.mxu0 %v1138
        %1180 = vmatprep.subr.bf16.mxu0 0
        %1181 = vmatpush1.bf16.msra.mxu0 %v1139
        %1182 = vmatprep.subr.bf16.mxu0 0
        %1183 = vmatpush1.bf16.msra.mxu0 %v1140
        %1184 = vmatprep.subr.bf16.mxu0 0
        %1185 = vmatpush1.bf16.msra.mxu0 %v1141
        %1186 = vmatprep.subr.bf16.mxu0 0
        %1187 = vmatpush1.bf16.msra.mxu0 %v1142
        %1188 = vmatprep.subr.bf16.mxu0 0
        %1189 = vmatpush1.bf16.msra.mxu0 %v1143
        %1190 = vmatprep.subr.bf16.mxu0 0
        %1191 = vmatpush1.bf16.msra.mxu0 %v1144
        %1192 = vmatprep.subr.bf16.mxu0 0
        %1193 = vmatpush1.bf16.msra.mxu0 %v1145
        %1194 = vmatprep.mubr.bf16.mxu0 %v1026
        %1195 = vmatmul.mubr.bf16.gmra.mrb[0].mxu0 %v1025
        %v1196 = vpop.f32.mrb[0].mxu0
        %v1197 = vadd.f32 %v1064, %v1196
        %v1198 = vpop.f32.mrb[0].mxu0
        %v1199 = vpop.f32.mrb[0].mxu0
        %v1200 = vpop.f32.mrb[0].mxu0
        %1201 = vdwg.mxu0
        %v1202 = vmax.f32 %v1197, 0.0
        %v1203 = vpack.c.bf16 %v1202, %v1202
        %v1204 = vld [vmem:[%s7] sm:$0xf]
        %v1205 = vld [vmem:[%s7 + $0x4] sm:$0xf]
        %v1206 = vld [vmem:[%s7 + $0x8] sm:$0xf]
        %v1207 = vld [vmem:[%s7 + $0xc] sm:$0xf]
        %v1208 = vld [vmem:[%s7 + $0x10] sm:$0xf]
        %v1209 = vld [vmem:[%s7 + $0x14] sm:$0xf]
        %v1210 = vld [vmem:[%s7 + $0x18] sm:$0x1]
        %v1211 = vld [vmem:[%s8] sm:$0x1]
        %v1213 = vlaneseq
        %v1214 = vshrl.u32 %v1213, 7
        %v1215 = vsub.s32 0, %v1214
        %v1216 = vrot.slane %v1211, %v1215
        %v1225 = vunpack.c.l.b16 %v1204
        %v1226 = vunpack.c.l.b16 %v1205
        %v1227 = vunpack.c.l.b16 %v1206
        %v1228 = vunpack.c.l.b16 %v1207
        %v1229 = vunpack.c.l.b16 %v1208
        %v1230 = vunpack.c.l.b16 %v1209
        %v1231 = vunpack.c.l.b16 %v1210
        %v1232 = vpack.c.b16 %v1226, %v1225
        %v1233 = vpack.c.b16 %v1228, %v1227
        %v1234 = vpack.c.b16 %v1230, %v1229
        %v1235 = vpack.c.b16 %v1231, %v1231
        %vm1239 = vcmask 408576
        %v1241 = vsel %vm1239, %v1203, 0
        %vm1243 = vcmask 1040384
        %v1245 = vsel %vm1243, %v1235, 0
        %1247 = vmatprep.subr.bf16.mxu0 0
        %1248 = vmatpush1.bf16.msra.mxu0 %v1232
        %1249 = vmatprep.subr.bf16.mxu0 0
        %1250 = vmatpush1.bf16.msra.mxu0 %v1233
        %1251 = vmatprep.subr.bf16.mxu0 0
        %1252 = vmatpush1.bf16.msra.mxu0 %v1234
        %1253 = vmatprep.subr.bf16.mxu0 0
        %1254 = vmatpush1.bf16.msra.mxu0 %v1245
        %1255 = vmatprep.subr.bf16.mxu0 0
        %1256 = vmatpush1.bf16.msra.mxu0 0
        %1257 = vmatprep.subr.bf16.mxu0 0
        %1258 = vmatpush1.bf16.msra.mxu0 0
        %1259 = vmatprep.subr.bf16.mxu0 0
        %1260 = vmatpush1.bf16.msra.mxu0 0
        %1261 = vmatprep.subr.bf16.mxu0 0
        %1262 = vmatpush1.bf16.msra.mxu0 0
        %1263 = vmatprep.subr.bf16.mxu0 0
        %1264 = vmatpush1.bf16.msra.mxu0 0
        %1265 = vmatprep.subr.bf16.mxu0 0
        %1266 = vmatpush1.bf16.msra.mxu0 0
        %1267 = vmatprep.subr.bf16.mxu0 0
        %1268 = vmatpush1.bf16.msra.mxu0 0
        %1269 = vmatprep.subr.bf16.mxu0 0
        %1270 = vmatpush1.bf16.msra.mxu0 0
        %1271 = vmatprep.subr.bf16.mxu0 0
        %1272 = vmatpush1.bf16.msra.mxu0 0
        %1273 = vmatprep.subr.bf16.mxu0 0
        %1274 = vmatpush1.bf16.msra.mxu0 0
        %1275 = vmatprep.subr.bf16.mxu0 0
        %1276 = vmatpush1.bf16.msra.mxu0 0
        %1277 = vmatprep.subr.bf16.mxu0 0
        %1278 = vmatpush1.bf16.msra.mxu0 0
        %1279 = vmatprep.mubr.bf16.mxu0 0
        %1280 = vmatmul.mubr.bf16.gmra.mrb[0].mxu0 %v1241
        %v1281 = vpop.f32.mrb[0].mxu0
        %v1282 = vadd.f32 %v1216, %v1281
        %v1283 = vpop.f32.mrb[0].mxu0
        %v1284 = vpop.f32.mrb[0].mxu0
        %v1285 = vpop.f32.mrb[0].mxu0
        %1286 = vdwg.mxu0
        %v1287 = vmax.f32 %v1282, 0.0
        %vm1288 = vcmask 80896
        %v1289 = vsel %vm1288, %v1287, -inf
        %1290 = vmax.xlane.f32.xlu0 %v1289
        %v1291 = vpop.xlane.xlu0 %1290
        %v1292 = vsub.f32 %v1287, %v1291
        %v1293 = vmul.f32 %v1292, 1.442695
        %v1294 = vpow.pop %v1293
        %v1295 = vsel %vm1288, %v1294, 0.0
        %1296 = vadd.xlane.f32.xlu0 %v1295
        %v1297 = vpop.xlane.xlu0 %1296
        %v1298 = vlog2.pop %v1297
        %v1299 = vmul.f32 %v1298, 0.6931472
        %v1300 = vadd.f32 %v1299, %v1291
        %v1301 = vsub.f32 %v1287, %v1300
        %1302 = vst.msk [vmem:[%s338] sm:$0xff] %vm1288, %v1301
        %s1303 = sand.u32 %s226, 1
        %s1304 = scalar_lea.sflag [#allocation4], %s1303
        %s1305 = sand.u32 %s226, 1
        %s1306 = smul.addr %s1305, 8
        %s1307 = scalar_lea.vmem [#allocation5], %s1306
        // Predicated region
        $region61: #{net_forward.1} parent=55 // pred_check
          %p1308 = pneg %p236
        $region62: #{net_forward.1} parent=55 // pred_check_branch
          %1310 = sbr.rel (%p1308) target = $region64
        $region63: #{net_forward.1} parent=55 // pred_region
          %s1312 = ssub.s32 128, 128
          %1313 = vsyncadd %s1304, %s1312
          %s1314 = smul.addr %s24, 128
          %s1315 = scalar_lea.hbm %s9, %s1314
          %s1317 = sshll.u32 %s1307, 4
          %s1318 = int_to_ptr.vmem [resolvable:$true] %s1317
          %1320 = dma.vmem_to_hbm [thread:$0]  %s1318, 128, %s1315, %s1304
        $region64: #{net_forward.1} parent=55 // pred_fallthru
          _
      $region56: #{net_forward.1} parent=5 // pred_fallthru
        _
      %p1321 = scmp.le.s32.totalorder 2, %s19
      // Predicated region
      $region65: #{net_forward.1} parent=5 // pred_check
        %p1322 = pneg %p1321
      $region66: #{net_forward.1} parent=5 // pred_check_branch
        %1324 = sbr.rel (%p1322) target = $region68
      $region67: #{net_forward.1} parent=5 // pred_region
        %s1325 = ssub.s32 %s19, 2
        // Predicated region
        $region69: #{net_forward.1} parent=67 // pred_check
          %p1326 = pneg %p242
        $region70: #{net_forward.1} parent=67 // pred_check_branch
          %1328 = sbr.rel (%p1326) target = $region72
        $region71: #{net_forward.1} parent=67 // pred_region
          %s1329 = sand.u32 %s227, 1
          %s1330 = scalar_lea.sflag [#allocation4], %s1329
          %s1331 = sand.u32 %s227, 1
          %s1332 = smul.addr %s1331, 8
          %s1333 = scalar_lea.vmem [#allocation5], %s1332
          %1334 = dma.done %s1330, 128
        $region72: #{net_forward.1} parent=67 // pred_fallthru
          _
      $region68: #{net_forward.1} parent=5 // pred_fallthru
        _
    $region6: #{net_forward.1} parent=1 // loop_footer
      %s23 = sadd.s32 1, %s19
    $region7: #{net_forward.1} parent=1 // loop_footer_branch
      %18 = sbr.rel target = $region3
    $region8: #{net_forward.1} parent=1 // loop_exit
      _
    %1335 = vsyncpa [#allocation3], 1
    %s1336 = scalar_lea.sflag [#allocation3], 1
    %1337 = vsyncpa %s1336, 1
    %1338 = vsyncpa [#allocation4], 1
    %s1339 = scalar_lea.sflag [#allocation4], 1
    %1340 = vsyncpa %s1339, 1

</llo_original>
